<compile_context>
chip_gen: v7x
topology: tpu7x:2x2x1
jax: 0.10.0
libtpu: 0.0.40
codegen_flags: <defaults>
</compile_context>

<pallas_src>
import functools

import jax
import jax.numpy as jnp
from jax.experimental import pallas as pl
from jax.experimental.pallas import tpu as pltpu

INPUT_SIZE = 2
HIDDEN_SIZES = [10, 10]
OUTPUT_SIZE = 1
NUM_STEPS = 10
THRESHOLD = 1.0
RESET_VALUE = 0.0  # spikes are emitted before reset; value never reaches the output

_MAX_TILE_B = 64 * 1024          # 64K rows -> ~8 MiB double-buffered VMEM
_SMALL_BATCH_XLA_CUTOFF = 4096   # below this, a fused XLA graph beats launch cost


def snn_kernel(x_ref, w1_ref, w2_ref, w3_ref, b3_ref, o_ref, *, threshold):
    """One batch tile of the whole network, batch on the lane axis.

    x_ref : (2, TB)     fp32 activations (transposed: batch on lanes)
    w1_ref: (H1, 2)     layer-1 weights, PyTorch (out, in) layout
    w2_ref: (H2, H1)    layer-2 weights, PyTorch (out, in) layout
    w3_ref: (H2, 1)     head weights as a column
    b3_ref: (1, 1)      head bias, SMEM scalar
    o_ref : (1, TB)     lane-dense output row
    """
    xt = x_ref[...]
    w1 = w1_ref[...]
    w2 = w2_ref[...]
    w3 = w3_ref[...]
    b3 = b3_ref[0, 0]

    # Layer 1: K=2 contraction as a VPU broadcast-FMA -> (H1, TB).
    z1 = w1[:, 0:1] * xt[0:1, :] + w1[:, 1:2] * xt[1:2, :]
    s1 = (z1 >= threshold).astype(jnp.float32)

    # Layer 2: the only real matmul; N = batch sits on the MXU lane axis.
    z2 = jnp.dot(w2, s1, preferred_element_type=jnp.float32)       # (H2, TB)
    s2 = (z2 >= threshold).astype(jnp.float32)

    # Spikes are identical every step, so mean over num_steps == s2 exactly.
    # Head (H2 -> 1): elementwise mul + sublane reduce, lands lane-dense.
    out = jnp.sum(s2 * w3, axis=0, keepdims=True) + b3             # (1, TB)
    o_ref[...] = out.astype(o_ref.dtype)


def _xla_single_step(x, w1, w2, w3, b3, threshold):
    """Fused XLA path for tiny batches (launch overhead dominates there)."""
    s1 = (x @ w1.T >= threshold).astype(jnp.float32)
    s2 = (s1 @ w2.T >= threshold).astype(jnp.float32)
    return s2 @ w3.T + b3


def spiking_neural_network(x, w1, w2, w3, b3, *, num_steps=NUM_STEPS,
                           threshold=THRESHOLD, use_pallas=None,
                           tile_batch=None):
    """Wrapper. x: (B, input_size); w*: PyTorch-style (out, in); b3: (out,).

    `num_steps` is accepted for API parity with the PyTorch module; because the
    membrane potential is reset every step, the result is independent of it.
    """
    del num_steps  # mean over identical per-step spikes == single-step spikes
    B = x.shape[0]
    H1 = w1.shape[0]
    H2 = w2.shape[0]

    if use_pallas is None:
        use_pallas = B > _SMALL_BATCH_XLA_CUTOFF
    if not use_pallas:
        return _xla_single_step(x.astype(jnp.float32), w1.astype(jnp.float32),
                                w2.astype(jnp.float32), w3.astype(jnp.float32),
                                b3.astype(jnp.float32), threshold)

    # Batch tile: single block for moderate B (block == full dim, any B is
    # legal); otherwise lane-aligned 64K-row tiles with a cdiv grid (the
    # partial last block is masked by Pallas -- no full-array jnp.pad copy).
    if tile_batch is not None:
        TB = int(tile_batch)
    elif B <= _MAX_TILE_B:
        TB = B
    else:
        TB = _MAX_TILE_B
    assert TB == B or TB % 128 == 0, (
        "tile_batch must equal B or be a multiple of 128")
    grid = (pl.cdiv(B, TB),)

    # One-time lane-dense relayout of the input: batch goes onto lanes.
    xt = jnp.transpose(x.astype(jnp.float32))         # (INPUT_SIZE, B)
    w1f = w1.astype(jnp.float32)                       # (H1, INPUT_SIZE)
    w2f = w2.astype(jnp.float32)                       # (H2, H1)
    w3c = w3.reshape(-1, 1).astype(jnp.float32)        # (H2, 1) column
    b3r = b3.reshape(1, 1).astype(jnp.float32)         # (1, 1) SMEM scalar

    kernel = functools.partial(snn_kernel, threshold=threshold)
    out_row = pl.pallas_call(
        kernel,
        out_shape=jax.ShapeDtypeStruct((1, B), jnp.float32),
        grid=grid,
        in_specs=[
            pl.BlockSpec((INPUT_SIZE, TB), lambda i: (0, i)),
            pl.BlockSpec((H1, INPUT_SIZE), lambda i: (0, 0)),
            pl.BlockSpec((H2, H1), lambda i: (0, 0)),
            pl.BlockSpec((H2, 1), lambda i: (0, 0)),
            pl.BlockSpec(memory_space=pltpu.MemorySpace.SMEM),
        ],
        out_specs=pl.BlockSpec((1, TB), lambda i: (0, i)),
        compiler_params=pltpu.CompilerParams(
            dimension_semantics=("parallel",),
            vmem_limit_bytes=32 * 1024 * 1024),
    )(xt, w1f, w2f, w3c, b3r)

    return out_row.reshape(B, OUTPUT_SIZE)


def reference_forward(x, w1, w2, w3, b3, *, num_steps=NUM_STEPS,
                      threshold=THRESHOLD):
    """Pure-JAX reference mirroring the PyTorch module literally (with loop)."""
    outputs = []
    for _ in range(num_steps):
        h = x
        h = (h @ w1.T >= threshold).astype(jnp.float32)
        h = (h @ w2.T >= threshold).astype(jnp.float32)
        outputs.append(h)
    mean = jnp.stack(outputs, axis=1).mean(axis=1)
    return mean @ w3.T + b3


if __name__ == "__main__":
    key = jax.random.PRNGKey(0)
    kx, k1, k2, k3, kb = jax.random.split(key, 5)

    # Deterministic parameter init (PyTorch param shapes: (out, in)).
    w1 = jax.random.normal(k1, (HIDDEN_SIZES[0], INPUT_SIZE), jnp.float32)
    w2 = jax.random.normal(k2, (HIDDEN_SIZES[1], HIDDEN_SIZES[0]), jnp.float32)
    w3 = jax.random.normal(k3, (OUTPUT_SIZE, HIDDEN_SIZES[1]), jnp.float32) * 0.1
    b3 = jax.random.normal(kb, (OUTPUT_SIZE,), jnp.float32) * 0.1

    # Small-shape check: single lane-dense block through the Pallas kernel.
    B = 8
    x = jax.random.normal(kx, (B, INPUT_SIZE), jnp.float32)
    out = spiking_neural_network(x, w1, w2, w3, b3, num_steps=NUM_STEPS,
                                 use_pallas=True)
    out = jax.block_until_ready(out)
    ref = reference_forward(x, w1, w2, w3, b3, num_steps=NUM_STEPS)
    assert out.shape == (B, OUTPUT_SIZE), out.shape
    assert jnp.allclose(out, ref, atol=1e-5, rtol=1e-5), (out, ref)

    # Multi-tile check with a non-divisible tail block (grid = 3, last block
    # partial) to exercise the masked-edge path and the fixed-weight respecs.
    B2 = 300
    x2 = jax.random.normal(kx, (B2, INPUT_SIZE), jnp.float32)
    out2 = spiking_neural_network(x2, w1, w2, w3, b3, num_steps=NUM_STEPS,
                                  use_pallas=True, tile_batch=128)
    out2 = jax.block_until_ready(out2)
    ref2 = reference_forward(x2, w1, w2, w3, b3, num_steps=NUM_STEPS)
    assert out2.shape == (B2, OUTPUT_SIZE), out2.shape
    assert jnp.allclose(out2, ref2, atol=1e-5, rtol=1e-5), (out2, ref2)

    # XLA fast path (what tiny batches get by default) must agree as well.
    out3 = spiking_neural_network(x, w1, w2, w3, b3, num_steps=NUM_STEPS,
                                  use_pallas=False)
    assert jnp.allclose(out3, ref, atol=1e-5, rtol=1e-5), (out3, ref)

    print("KERNEL_OK")
</pallas_src>

<mosaic_0001>
module attributes {stable_mosaic.version = 11 : i64} {
  func.func @snn_kernel(%arg0: i32, %arg1: memref<2x8xf32, #tpu.memory_space<vmem>>, %arg2: memref<10x2xf32, #tpu.memory_space<vmem>>, %arg3: memref<10x10xf32, #tpu.memory_space<vmem>>, %arg4: memref<10x1xf32, #tpu.memory_space<vmem>>, %arg5: memref<1x1xf32, #tpu.memory_space<smem>>, %arg6: memref<1x8xf32, #tpu.memory_space<vmem>>) attributes {dimension_semantics = [#tpu.dimension_semantics<parallel>], iteration_bounds = array<i64: 1>, scalar_prefetch = 0 : i64, scratch_operands = 0 : i64, tpu.core_type = #tpu.core_type<tc>, window_params = [{transform_indices = @transform_0, window_bounds = array<i64: 2, 8>}, {pipeline_mode = #tpu.pipeline_mode<synchronous>, transform_indices = @transform_1, window_bounds = array<i64: 10, 2>}, {pipeline_mode = #tpu.pipeline_mode<synchronous>, transform_indices = @transform_2, window_bounds = array<i64: 10, 10>}, {pipeline_mode = #tpu.pipeline_mode<synchronous>, transform_indices = @transform_3, window_bounds = array<i64: 10, 1>}, {transform_indices = @transform_4, window_bounds = array<i64: 1, 1>}, {transform_indices = @transform_5, window_bounds = array<i64: 1, 8>}]} {
    %c0 = arith.constant 0 : index
    %c0_0 = arith.constant 0 : index
    %0 = vector.load %arg1[%c0, %c0_0] : memref<2x8xf32, #tpu.memory_space<vmem>>, vector<2x8xf32>
    %c0_1 = arith.constant 0 : index
    %c0_2 = arith.constant 0 : index
    %1 = vector.load %arg2[%c0_1, %c0_2] : memref<10x2xf32, #tpu.memory_space<vmem>>, vector<10x2xf32>
    %c0_3 = arith.constant 0 : index
    %c0_4 = arith.constant 0 : index
    %2 = vector.load %arg3[%c0_3, %c0_4] : memref<10x10xf32, #tpu.memory_space<vmem>>, vector<10x10xf32>
    %c0_5 = arith.constant 0 : index
    %c0_6 = arith.constant 0 : index
    %3 = vector.load %arg4[%c0_5, %c0_6] : memref<10x1xf32, #tpu.memory_space<vmem>>, vector<10x1xf32>
    %c0_7 = arith.constant 0 : index
    %c0_8 = arith.constant 0 : index
    %4 = memref.load %arg5[%c0_7, %c0_8] : memref<1x1xf32, #tpu.memory_space<smem>>
    %5 = vector.extract_strided_slice %1 {offsets = [0, 0], sizes = [10, 1], strides = [1, 1]} : vector<10x2xf32> to vector<10x1xf32>
    %6 = vector.extract_strided_slice %0 {offsets = [0, 0], sizes = [1, 8], strides = [1, 1]} : vector<2x8xf32> to vector<1x8xf32>
    %7 = vector.broadcast %5 : vector<10x1xf32> to vector<10x8xf32>
    %8 = vector.broadcast %6 : vector<1x8xf32> to vector<10x8xf32>
    %9 = arith.mulf %7, %8 : vector<10x8xf32>
    %10 = vector.extract_strided_slice %1 {offsets = [0, 1], sizes = [10, 1], strides = [1, 1]} : vector<10x2xf32> to vector<10x1xf32>
    %11 = vector.extract_strided_slice %0 {offsets = [1, 0], sizes = [1, 8], strides = [1, 1]} : vector<2x8xf32> to vector<1x8xf32>
    %12 = vector.broadcast %10 : vector<10x1xf32> to vector<10x8xf32>
    %13 = vector.broadcast %11 : vector<1x8xf32> to vector<10x8xf32>
    %14 = arith.mulf %12, %13 : vector<10x8xf32>
    %15 = arith.addf %9, %14 : vector<10x8xf32>
    %cst = arith.constant 1.000000e+00 : f32
    %16 = vector.broadcast %cst : f32 to vector<10x8xf32>
    %17 = arith.cmpf oge, %15, %16 : vector<10x8xf32>
    %18 = arith.extui %17 : vector<10x8xi1> to vector<10x8xi32>
    %19 = arith.sitofp %18 : vector<10x8xi32> to vector<10x8xf32>
    %cst_9 = arith.constant dense<0.000000e+00> : vector<10x8xf32>
    %20 = tpu.matmul %2, %19, %cst_9 {dimension_numbers = #tpu.dot_dimension_numbers<[1], [0], [0], [1], [0, 0, 1, 1], [], []>} : vector<10x10xf32>, vector<10x8xf32>, vector<10x8xf32> -> vector<10x8xf32>
    %cst_10 = arith.constant 1.000000e+00 : f32
    %21 = vector.broadcast %cst_10 : f32 to vector<10x8xf32>
    %22 = arith.cmpf oge, %20, %21 : vector<10x8xf32>
    %23 = arith.extui %22 : vector<10x8xi1> to vector<10x8xi32>
    %24 = arith.sitofp %23 : vector<10x8xi32> to vector<10x8xf32>
    %25 = vector.broadcast %3 : vector<10x1xf32> to vector<10x8xf32>
    %26 = arith.mulf %24, %25 : vector<10x8xf32>
    %cst_11 = arith.constant dense<0.000000e+00> : vector<8xf32>
    %27 = vector.multi_reduction <add>, %26, %cst_11 [0] : vector<10x8xf32> to vector<8xf32>
    %28 = vector.shape_cast %27 : vector<8xf32> to vector<1x8xf32>
    %29 = vector.broadcast %4 : f32 to vector<1x8xf32>
    %30 = arith.addf %28, %29 : vector<1x8xf32>
    %c0_12 = arith.constant 0 : index
    %c0_13 = arith.constant 0 : index
    %31 = vector.load %arg6[%c0_12, %c0_13] : memref<1x8xf32, #tpu.memory_space<vmem>>, vector<1x8xf32>
    tpu.vector_store %arg6[%c0_12, %c0_13], %30 {strides = array<i32>} : memref<1x8xf32, #tpu.memory_space<vmem>>, vector<1x8xf32>,
    return
  }
  func.func @transform_0(%arg0: i32) -> (i32, i32) {
    %c0_i32 = arith.constant 0 : i32
    %c0_i32_0 = arith.constant 0 : i32
    return %c0_i32, %arg0 : i32, i32
  }
  func.func @transform_1(%arg0: i32) -> (i32, i32) {
    %c0_i32 = arith.constant 0 : i32
    %c0_i32_0 = arith.constant 0 : i32
    %c0_i32_1 = arith.constant 0 : i32
    return %c0_i32, %c0_i32_0 : i32, i32
  }
  func.func @transform_2(%arg0: i32) -> (i32, i32) {
    %c0_i32 = arith.constant 0 : i32
    %c0_i32_0 = arith.constant 0 : i32
    %c0_i32_1 = arith.constant 0 : i32
    return %c0_i32, %c0_i32_0 : i32, i32
  }
  func.func @transform_3(%arg0: i32) -> (i32, i32) {
    %c0_i32 = arith.constant 0 : i32
    %c0_i32_0 = arith.constant 0 : i32
    %c0_i32_1 = arith.constant 0 : i32
    return %c0_i32, %c0_i32_0 : i32, i32
  }
  func.func @transform_4(%arg0: i32) -> (i32, i32) {
    %c0_i32 = arith.constant 0 : i32
    %c0_i32_0 = arith.constant 0 : i32
    %c0_i32_1 = arith.constant 0 : i32
    return %c0_i32, %c0_i32_0 : i32, i32
  }
  func.func @transform_5(%arg0: i32) -> (i32, i32) {
    %c0_i32 = arith.constant 0 : i32
    %c0_i32_0 = arith.constant 0 : i32
    return %c0_i32, %arg0 : i32, i32
  }
}

</mosaic_0001>

<llo_original>
// kernel: tpu_custom_call.1
$region0: #{tpu_custom_call.1}
  #allocation0 [shape = 'u32[]', space=smem, size = 0x4, offset = 0x4, fixed_abs, tag = 'smem constant byte address 0x4 - core index']
  #allocation1 [shape = 'u32[144,128]{1,0:T(1,128)}', space=vmem, size = 0x12000, scoped, tag = 'internal scratch']
  #allocation2 [shape = 'f32[1,1]{1,0:T(1,128)S(6)}', space=smem, size = 0x200, scoped, tag = 'scoped memory for tpu_custom_call.1']
  %s0 = inlined_call_operand.vmem [shape: f32[2,8], index: 0, kind: input, shape index: {}]
  %s1 = inlined_call_operand.vmem [shape: f32[10,2], index: 1, kind: input, shape index: {}]
  %s2 = inlined_call_operand.vmem [shape: f32[10,10], index: 2, kind: input, shape index: {}]
  %s3 = inlined_call_operand.vmem [shape: f32[10,1], index: 3, kind: input, shape index: {}]
  %s4 = inlined_call_operand.<no memory space> [shape: f32[1,1], index: 4, kind: input, shape index: {}]
  %s5 = inlined_call_operand.hbm [shape: f32[1,8], index: 5, kind: output, shape index: {}]
  %s6 = sld [smem:[#allocation0]]
  $region30: #{tpu_custom_call.1} parent=0
    _
  %s8 = ssub.s32 1, %s6
  %s9 = scalar_select 0, %s8, %s6
  %10 = sst [smem:[#allocation2]] %s4
  $region1: #{tpu_custom_call.1} parent=0
    #allocation3 [shape = 'u8[512]{0}', space=vmem, size = 0x400, scoped, tag = 'output window, operand 0, single buffered']
    #allocation4 [shape = 's32[1]{0}', space=sflag, size = 0x4, scoped, tag = 'scoped memory for tpu_custom_call.1']
    %11 = vsyncpa [#allocation4], 0
    // Predicated region
    $region2: #{tpu_custom_call.1} parent=1 // pred_check
      _
    $region3: #{tpu_custom_call.1} parent=1 // pred_check_branch
      %13 = sbr.rel (0) target = $region5
    $region4: #{tpu_custom_call.1} parent=1 // pred_region
      _
    $region5: #{tpu_custom_call.1} parent=1 // pred_fallthru
      _
    // Predicated region
    $region6: #{tpu_custom_call.1} parent=1 // pred_check
      _
    $region7: #{tpu_custom_call.1} parent=1 // pred_check_branch
      %15 = sbr.rel (0) target = $region9
    $region8: #{tpu_custom_call.1} parent=1 // pred_region
      _
    $region9: #{tpu_custom_call.1} parent=1 // pred_fallthru
      _
    // Predicated region
    $region10: #{tpu_custom_call.1} parent=1 // pred_check
      _
    $region11: #{tpu_custom_call.1} parent=1 // pred_check_branch
      %17 = sbr.rel (0) target = $region13
    $region12: #{tpu_custom_call.1} parent=1 // pred_region
      _
    $region13: #{tpu_custom_call.1} parent=1 // pred_fallthru
      _
    // Predicated region
    $region14: #{tpu_custom_call.1} parent=1 // pred_check
      _
    $region15: #{tpu_custom_call.1} parent=1 // pred_check_branch
      %19 = sbr.rel (0) target = $region17
    $region16: #{tpu_custom_call.1} parent=1 // pred_region
      _
    $region17: #{tpu_custom_call.1} parent=1 // pred_fallthru
      _
    // Predicated region
    $region18: #{tpu_custom_call.1} parent=1 // pred_check
      _
    $region19: #{tpu_custom_call.1} parent=1 // pred_check_branch
      %21 = sbr.rel (0) target = $region21
    $region20: #{tpu_custom_call.1} parent=1 // pred_region
      _
    $region21: #{tpu_custom_call.1} parent=1 // pred_fallthru
      _
    %v22 = vld [vmem:[%s0] sm:$0x3]
    %v23 = vld [vmem:[%s1] sm:$0xff]
    %v24 = vld [vmem:[%s1 + $0x8] sm:$0x3]
    %v25 = vld [vmem:[%s2] sm:$0xff]
    %v26 = vld [vmem:[%s2 + $0x8] sm:$0x3]
    %v27 = vld [vmem:[%s3] sm:$0xff]
    %v28 = vld [vmem:[%s3 + $0x8] sm:$0x3]
    %s29 = sld [smem:[#allocation2]]
    %31 = vset.pattern.permute.xlu0 0
    %32 = vperm.xlu0 %31, %v23
    %v33 = vpop.permute.xlu0 %32
    %36 = vset.pattern.permute.xlu0 0
    %37 = vperm.xlu0 %36, %v24
    %v38 = vpop.permute.xlu0 %37
    %v40 = vlaneseq
    %v41 = vshrl.u32 %v40, 7
    %v42 = vsub.s32 0, %v41
    %v43 = vrot.slane %v22, %v42
    %v44 = vmul.f32 %v33, %v43
    %v45 = vmul.f32 %v38, %v43
    %46 = vset.pattern.permute.xlu0 1
    %47 = vperm.xlu0 %46, %v23
    %v48 = vpop.permute.xlu0 %47
    %50 = vset.pattern.permute.xlu0 1
    %51 = vperm.xlu0 %50, %v24
    %v52 = vpop.permute.xlu0 %51
    %v54 = vlaneseq
    %v55 = vshrl.u32 %v54, 7
    %v56 = vsub.s32 1, %v55
    %v57 = vrot.slane %v22, %v56
    %v58 = vmul.f32 %v48, %v57
    %v59 = vmul.f32 %v52, %v57
    %v60 = vadd.f32 %v44, %v58
    %v61 = vadd.f32 %v45, %v59
    %vm62 = vcmp.ge.f32.partialorder %v60, 1.0
    %vm63 = vcmp.ge.f32.partialorder %v61, 1.0
    %v64 = vsel %vm62, 1, 0
    %v65 = vsel %vm63, 1, 0
    %v66 = vcvt.s32.f32 %v64
    %v67 = vcvt.s32.f32 %v65
    %vm68 = vcmask 80896
    %v70 = vsel %vm68, %v25, 0
    %v73 = vsel %vm68, %v26, 0
    %vm75 = vcmask 1041408
    %v77 = vsel %vm75, %v67, 0
    %79 = vmatprep.subr.mxu0 0.0
    %80 = vmatpush1.msra.mxu0 %v66
    %81 = vmatprep.subr.mxu0 0.0
    %82 = vmatpush1.msra.mxu0 %v77
    %83 = vmatprep.subr.mxu0 0.0
    %84 = vmatpush1.msra.mxu0 0.0
    %85 = vmatprep.subr.mxu0 0.0
    %86 = vmatpush1.msra.mxu0 0.0
    %87 = vmatprep.subr.mxu0 0.0
    %88 = vmatpush1.msra.mxu0 0.0
    %89 = vmatprep.subr.mxu0 0.0
    %90 = vmatpush1.msra.mxu0 0.0
    %91 = vmatprep.subr.mxu0 0.0
    %92 = vmatpush1.msra.mxu0 0.0
    %93 = vmatprep.subr.mxu0 0.0
    %94 = vmatpush1.msra.mxu0 0.0
    %95 = vmatprep.subr.mxu0 0.0
    %96 = vmatpush1.msra.mxu0 0.0
    %97 = vmatprep.subr.mxu0 0.0
    %98 = vmatpush1.msra.mxu0 0.0
    %99 = vmatprep.subr.mxu0 0.0
    %100 = vmatpush1.msra.mxu0 0.0
    %101 = vmatprep.subr.mxu0 0.0
    %102 = vmatpush1.msra.mxu0 0.0
    %103 = vmatprep.subr.mxu0 0.0
    %104 = vmatpush1.msra.mxu0 0.0
    %105 = vmatprep.subr.mxu0 0.0
    %106 = vmatpush1.msra.mxu0 0.0
    %107 = vmatprep.subr.mxu0 0.0
    %108 = vmatpush1.msra.mxu0 0.0
    %109 = vmatprep.subr.mxu0 0.0
    %110 = vmatpush1.msra.mxu0 0.0
    %111 = vmatprep.subr.mxu0 0.0
    %112 = vmatpush1.msra.mxu0 0.0
    %113 = vmatprep.subr.mxu0 0.0
    %114 = vmatpush1.msra.mxu0 0.0
    %115 = vmatprep.subr.mxu0 0.0
    %116 = vmatpush1.msra.mxu0 0.0
    %117 = vmatprep.subr.mxu0 0.0
    %118 = vmatpush1.msra.mxu0 0.0
    %119 = vmatprep.subr.mxu0 0.0
    %120 = vmatpush1.msra.mxu0 0.0
    %121 = vmatprep.subr.mxu0 0.0
    %122 = vmatpush1.msra.mxu0 0.0
    %123 = vmatprep.subr.mxu0 0.0
    %124 = vmatpush1.msra.mxu0 0.0
    %125 = vmatprep.subr.mxu0 0.0
    %126 = vmatpush1.msra.mxu0 0.0
    %127 = vmatprep.subr.mxu0 0.0
    %128 = vmatpush1.msra.mxu0 0.0
    %129 = vmatprep.subr.mxu0 0.0
    %130 = vmatpush1.msra.mxu0 0.0
    %131 = vmatprep.subr.mxu0 0.0
    %132 = vmatpush1.msra.mxu0 0.0
    %133 = vmatprep.subr.mxu0 0.0
    %134 = vmatpush1.msra.mxu0 0.0
    %135 = vmatprep.subr.mxu0 0.0
    %136 = vmatpush1.msra.mxu0 0.0
    %137 = vmatprep.subr.mxu0 0.0
    %138 = vmatpush1.msra.mxu0 0.0
    %139 = vmatprep.subr.mxu0 0.0
    %140 = vmatpush1.msra.mxu0 0.0
    %141 = vmatprep.subr.mxu0 0.0
    %142 = vmatpush1.msra.mxu0 0.0
    %143 = vmatprep.mubr.f32.mxu0 0.0
    %144 = vmatmul.mubr.f32.gmra.mrb[0].mxu0 %v70
    %v145 = vpop.f32.mrb[0].mxu0
    %v146 = vadd.f32 0.0, %v145
    %v147 = vpop.f32.mrb[0].mxu0
    %148 = vmatprep.mubr.f32.mxu0 0.0
    %149 = vmatmul.mubr.f32.gmra.mrb[0].mxu0 %v73
    %v150 = vpop.f32.mrb[0].mxu0
    %v151 = vadd.f32 0.0, %v150
    %v152 = vpop.f32.mrb[0].mxu0
    %153 = vdwg.mxu0
    %vm154 = vcmp.ge.f32.partialorder %v146, 1.0
    %vm155 = vcmp.ge.f32.partialorder %v151, 1.0
    %v156 = vsel %vm154, 1, 0
    %v157 = vsel %vm155, 1, 0
    %v158 = vcvt.s32.f32 %v156
    %v159 = vcvt.s32.f32 %v157
    %161 = vset.pattern.permute.xlu0 0
    %162 = vperm.xlu0 %161, %v27
    %v163 = vpop.permute.xlu0 %162
    %166 = vset.pattern.permute.xlu0 0
    %167 = vperm.xlu0 %166, %v28
    %v168 = vpop.permute.xlu0 %167
    %v170 = vmul.f32 %v158, %v163
    %v171 = vmul.f32 %v159, %v168
    %vm172 = vcmask 64512
    %v173 = vsel %vm172, %v170, 0.0
    %vm174 = vcmask 58368
    %v175 = vsel %vm174, %v171, 0.0
    %v176 = vadd.f32 %v173, %v175
    %v177 = vrot.slane %v176, 4
    %v178 = vadd.f32 %v176, %v177
    %v179 = vrot.slane %v178, 2
    %v180 = vadd.f32 %v178, %v179
    %v181 = vrot.slane %v180, 1
    %v182 = vadd.f32 %v180, %v181
    %v183 = vstv %s29
    %v184 = vadd.f32 %v182, %v183
    %vm185 = vcmask 57344
    %186 = vst.msk [vmem:[#allocation3] sm:$0x1] %vm185, %v184
    // Predicated region
    $region22: #{tpu_custom_call.1} parent=1 // pred_check
      _
    $region23: #{tpu_custom_call.1} parent=1 // pred_check_branch
      %188 = sbr.rel (0) target = $region25
    $region24: #{tpu_custom_call.1} parent=1 // pred_region
      %s190 = ssub.s32 16, 16
      %191 = vsyncadd [#allocation4], %s190
      %s193 = sshll.u32 [#allocation3], 4
      %s194 = int_to_ptr.vmem [resolvable:$true] %s193
      %196 = dma.vmem_to_hbm [thread:$0]  %s194, 16, %s5, [#allocation4]
    $region25: #{tpu_custom_call.1} parent=1 // pred_fallthru
      _
    // Predicated region
    $region26: #{tpu_custom_call.1} parent=1 // pred_check
      _
    $region27: #{tpu_custom_call.1} parent=1 // pred_check_branch
      %198 = sbr.rel (0) target = $region29
    $region28: #{tpu_custom_call.1} parent=1 // pred_region
      %199 = dma.done [#allocation4], 16
    $region29: #{tpu_custom_call.1} parent=1 // pred_fallthru
      _
    %200 = vsyncpa [#allocation4], 1

</llo_original>
